<compile_context>
chip_gen: v7x
topology: tpu7x:2x2x1
jax: 0.10.0
libtpu: 0.0.40
codegen_flags: <defaults>
</compile_context>

<pallas_src>
import numpy as np
import jax
import jax.numpy as jnp
from jax.experimental import pallas as pl
from jax.experimental.pallas import tpu as pltpu


def _pe_kernel(time_ref, inv_ts_ref, out_ref):
    # time_ref:   (rows, 1)   float32 -- flattened (T*B) time stamps (row tile)
    # inv_ts_ref: (1, H)      float32 -- precomputed reciprocals of timescales
    # out_ref:    (rows, 2*H) float32
    H = inv_ts_ref.shape[-1]
    # VPU multiply instead of divide (reciprocals precomputed on host).
    scaled = time_ref[...] * inv_ts_ref[...]          # (rows, H) via broadcast
    # Write halves in place: no concatenate temporary, no relayout copy.
    out_ref[:, :H] = jnp.sin(scaled)
    out_ref[:, H:] = jnp.cos(scaled)


def positional_encoding_tf(P_time, d_model, max_len=500, MAX=10000, row_tile=512):
    """JAX/Pallas equivalent of PositionalEncodingTF.forward.

    P_time: [T, B] array of time stamps. Returns [T, B, d_model] float32.
    """
    del MAX  # unused by the reference forward pass
    assert d_model % 2 == 0, "d_model must be even (sin/cos halves)"
    T, B = P_time.shape
    H = d_model // 2

    # Deterministic "parameter" setup (matches np.linspace exponentiation in
    # __init__/getPE).  Reciprocals computed in float64, then cast to float32.
    timescales = max_len ** np.linspace(0.0, 1.0, H)
    inv_ts = jnp.asarray((1.0 / timescales).astype(np.float32)).reshape(1, H)

    # Flatten (T, B) -> rows; pick a row tile and pad rows to a multiple of it.
    N = T * B
    if N >= row_tile:
        tile = row_tile
    else:
        tile = max(8, -(-N // 8) * 8)           # round up to sublane multiple
    n_pad = -(-N // tile) * tile

    times = P_time.astype(jnp.float32).reshape(N, 1)
    if n_pad != N:
        times = jnp.pad(times, ((0, n_pad - N), (0, 0)))

    grid = (n_pad // tile,)
    out = pl.pallas_call(
        _pe_kernel,
        out_shape=jax.ShapeDtypeStruct((n_pad, d_model), jnp.float32),
        grid=grid,
        in_specs=[
            pl.BlockSpec((tile, 1), lambda i: (i, 0)),
            pl.BlockSpec((1, H), lambda i: (0, 0)),
        ],
        out_specs=pl.BlockSpec((tile, d_model), lambda i: (i, 0)),
        compiler_params=pltpu.CompilerParams(
            dimension_semantics=("parallel",)),
    )(times, inv_ts)

    return out[:N].reshape(T, B, d_model)


def _reference(P_time, d_model, max_len=500):
    # Pure-JAX reference mirroring the PyTorch code path (true divide).
    H = d_model // 2
    timescales = np.asarray(max_len ** np.linspace(0.0, 1.0, H), dtype=np.float32)
    times = P_time.astype(jnp.float32)[:, :, None]
    scaled = times / jnp.asarray(timescales)[None, None, :]
    return jnp.concatenate([jnp.sin(scaled), jnp.cos(scaled)], axis=-1)


if __name__ == "__main__":
    d_model = 32
    max_len = 500

    key = jax.random.PRNGKey(0)
    k1, k2 = jax.random.split(key)

    # Small demo shape implied by the module: P_time is [T, B] = [8, 2].
    T, B = 8, 2
    P_time = jax.random.uniform(k1, (T, B), dtype=jnp.float32) * max_len
    out = jax.block_until_ready(positional_encoding_tf(P_time, d_model, max_len=max_len))
    ref = _reference(P_time, d_model, max_len=max_len)
    assert out.shape == (T, B, d_model)
    assert out.dtype == jnp.float32
    # atol loosened slightly: reciprocal-multiply introduces ~1-2 ulp drift in
    # scaled_time (up to ~max_len * eps before the sin/cos range reduction).
    np.testing.assert_allclose(np.asarray(out), np.asarray(ref), rtol=1e-5, atol=5e-4)

    # Larger shape to exercise the tiled / pipelined grid (multiple row tiles).
    T2, B2 = 96, 16  # N = 1536 -> 3 tiles of 512 rows
    P_time2 = jax.random.uniform(k2, (T2, B2), dtype=jnp.float32) * max_len
    out2 = jax.block_until_ready(positional_encoding_tf(P_time2, d_model, max_len=max_len))
    ref2 = _reference(P_time2, d_model, max_len=max_len)
    assert out2.shape == (T2, B2, d_model)
    np.testing.assert_allclose(np.asarray(out2), np.asarray(ref2), rtol=1e-5, atol=5e-4)

    print("KERNEL_OK")
</pallas_src>

<mosaic_0001>
module attributes {stable_mosaic.version = 11 : i64} {
  func.func @_pe_kernel(%arg0: i32, %arg1: memref<16x1xf32, #tpu.memory_space<vmem>>, %arg2: memref<1x16xf32, #tpu.memory_space<vmem>>, %arg3: memref<16x32xf32, #tpu.memory_space<vmem>>) attributes {dimension_semantics = [#tpu.dimension_semantics<parallel>], iteration_bounds = array<i64: 1>, scalar_prefetch = 0 : i64, scratch_operands = 0 : i64, tpu.core_type = #tpu.core_type<tc>, window_params = [{transform_indices = @transform_0, window_bounds = array<i64: 16, 1>}, {pipeline_mode = #tpu.pipeline_mode<synchronous>, transform_indices = @transform_1, window_bounds = array<i64: 1, 16>}, {transform_indices = @transform_2, window_bounds = array<i64: 16, 32>}]} {
    %c0 = arith.constant 0 : index
    %c0_0 = arith.constant 0 : index
    %0 = vector.load %arg1[%c0, %c0_0] : memref<16x1xf32, #tpu.memory_space<vmem>>, vector<16x1xf32>
    %c0_1 = arith.constant 0 : index
    %c0_2 = arith.constant 0 : index
    %1 = vector.load %arg2[%c0_1, %c0_2] : memref<1x16xf32, #tpu.memory_space<vmem>>, vector<1x16xf32>
    %2 = vector.broadcast %0 : vector<16x1xf32> to vector<16x16xf32>
    %3 = vector.broadcast %1 : vector<1x16xf32> to vector<16x16xf32>
    %4 = arith.mulf %2, %3 : vector<16x16xf32>
    %5 = math.sin %4 : vector<16x16xf32>
    %c0_3 = arith.constant 0 : index
    %c0_4 = arith.constant 0 : index
    %6 = vector.load %arg3[%c0_3, %c0_4] : memref<16x32xf32, #tpu.memory_space<vmem>>, vector<16x16xf32>
    tpu.vector_store %arg3[%c0_3, %c0_4], %5 {strides = array<i32>} : memref<16x32xf32, #tpu.memory_space<vmem>>, vector<16x16xf32>,
    %7 = math.cos %4 : vector<16x16xf32>
    %c0_5 = arith.constant 0 : index
    %c16 = arith.constant 16 : index
    %8 = vector.load %arg3[%c0_5, %c16] : memref<16x32xf32, #tpu.memory_space<vmem>>, vector<16x16xf32>
    tpu.vector_store %arg3[%c0_5, %c16], %7 {strides = array<i32>} : memref<16x32xf32, #tpu.memory_space<vmem>>, vector<16x16xf32>,
    return
  }
  func.func @transform_0(%arg0: i32) -> (i32, i32) {
    %c0_i32 = arith.constant 0 : i32
    %c0_i32_0 = arith.constant 0 : i32
    return %arg0, %c0_i32 : i32, i32
  }
  func.func @transform_1(%arg0: i32) -> (i32, i32) {
    %c0_i32 = arith.constant 0 : i32
    %c0_i32_0 = arith.constant 0 : i32
    %c0_i32_1 = arith.constant 0 : i32
    return %c0_i32, %c0_i32_0 : i32, i32
  }
  func.func @transform_2(%arg0: i32) -> (i32, i32) {
    %c0_i32 = arith.constant 0 : i32
    %c0_i32_0 = arith.constant 0 : i32
    return %arg0, %c0_i32 : i32, i32
  }
}

</mosaic_0001>

<llo_original>
// kernel: tpu_custom_call.1
$region0: #{tpu_custom_call.1}
  #allocation0 [shape = 'u32[]', space=smem, size = 0x4, offset = 0x4, fixed_abs, tag = 'smem constant byte address 0x4 - core index']
  #allocation1 [shape = 'u32[144,128]{1,0:T(1,128)}', space=vmem, size = 0x12000, scoped, tag = 'internal scratch']
  %s0 = inlined_call_operand.vmem [shape: f32[16,1], index: 0, kind: input, shape index: {}]
  %s1 = inlined_call_operand.vmem [shape: f32[1,16], index: 1, kind: input, shape index: {}]
  %s2 = inlined_call_operand.hbm [shape: f32[16,32], index: 2, kind: output, shape index: {}]
  %s3 = sld [smem:[#allocation0]]
  $region18: #{tpu_custom_call.1} parent=0
    _
  %s5 = ssub.s32 1, %s3
  %s6 = scalar_select 0, %s5, %s3
  $region1: #{tpu_custom_call.1} parent=0
    #allocation2 [shape = 'u8[8192]{0}', space=vmem, size = 0x2000, scoped, tag = 'output window, operand 0, single buffered']
    #allocation3 [shape = 's32[1]{0}', space=sflag, size = 0x4, scoped, tag = 'scoped memory for tpu_custom_call.1']
    %7 = vsyncpa [#allocation3], 0
    // Predicated region
    $region2: #{tpu_custom_call.1} parent=1 // pred_check
      _
    $region3: #{tpu_custom_call.1} parent=1 // pred_check_branch
      %9 = sbr.rel (0) target = $region5
    $region4: #{tpu_custom_call.1} parent=1 // pred_region
      _
    $region5: #{tpu_custom_call.1} parent=1 // pred_fallthru
      _
    // Predicated region
    $region6: #{tpu_custom_call.1} parent=1 // pred_check
      _
    $region7: #{tpu_custom_call.1} parent=1 // pred_check_branch
      %11 = sbr.rel (0) target = $region9
    $region8: #{tpu_custom_call.1} parent=1 // pred_region
      _
    $region9: #{tpu_custom_call.1} parent=1 // pred_fallthru
      _
    %v12 = vld [vmem:[%s0] sm:$0xff]
    %v13 = vld [vmem:[%s0 + $0x8] sm:$0xff]
    %v14 = vld [vmem:[%s1] sm:$0x1]
    %16 = vset.pattern.permute.xlu0 0
    %17 = vperm.xlu0 %16, %v12
    %v18 = vpop.permute.xlu0 %17
    %21 = vset.pattern.permute.xlu0 0
    %22 = vperm.xlu0 %21, %v13
    %v23 = vpop.permute.xlu0 %22
    %v26 = vlaneseq
    %v27 = vshrl.u32 %v26, 7
    %v28 = vsub.s32 0, %v27
    %v29 = vrot.slane %v14, %v28
    %v31 = vmul.f32 %v18, %v29
    %v32 = vmul.f32 %v23, %v29
    %v33 = vand.u32 2147483647, %v31
    %vm34 = vcmp.le.f32.partialorder %v33, 0.7853982
    %vm35 = vcmp.lt.s32.totalorder %v31, 0
    %v36 = vand.u32 %v31, 2139095040
    %v37 = vshrl.u32 %v36, 23
    %v38 = vsub.s32 %v37, 127
    %v39 = vand.u32 2147483647, %v31
    %v40 = vand.u32 %v39, 8388607
    %v41 = vor.u32 %v40, 8388608
    %v42 = vsub.s32 0, %v41
    %v43 = vadd.s32 %v38, 1
    %vm44 = vcmp.gt.s32.totalorder %v43, 0
    %v45 = vsel %vm44, %v43, 0
    %v46 = vshrl.u32 %v45, 5
    %v47 = vand.u32 %v45, 31
    %v48 = vsub.s32 32, %v47
    %v49 = vshrl.u32 683565275, %v48
    %v50 = vshll.u32 683565275, %v47
    %v51 = vshrl.u32 2475754826, %v48
    %v52 = vor.u32 %v50, %v51
    %v53 = vshll.u32 2475754826, %v47
    %v54 = vshrl.u32 2131351028, %v48
    %v55 = vor.u32 %v53, %v54
    %v56 = vshll.u32 2131351028, %v47
    %v57 = vshrl.u32 2102212464, %v48
    %v58 = vor.u32 %v56, %v57
    %v59 = vshll.u32 2102212464, %v47
    %v60 = vshrl.u32 920167782, %v48
    %v61 = vor.u32 %v59, %v60
    %v62 = vshll.u32 920167782, %v47
    %v63 = vshrl.u32 1326507024, %v48
    %v64 = vor.u32 %v62, %v63
    %vm65 = vcmp.lt.s32.totalorder %v46, 1
    %vm66 = vcmp.lt.s32.totalorder %v46, 2
    %vm67 = vcmp.lt.s32.totalorder %v46, 3
    %vm68 = vcmp.lt.s32.totalorder %v46, 4
    %v69 = vsel %vm65, %v49, %v52
    %v70 = vsel %vm68, %v58, 2102212464
    %v71 = vsel %vm67, %v55, %v70
    %v72 = vsel %vm66, %v69, %v71
    %v73 = vsel %vm65, %v52, %v55
    %v74 = vsel %vm68, %v61, 920167782
    %v75 = vsel %vm67, %v58, %v74
    %v76 = vsel %vm66, %v73, %v75
    %v77 = vsel %vm65, %v55, %v58
    %v78 = vsel %vm68, %v64, 1326507024
    %v79 = vsel %vm67, %v61, %v78
    %v80 = vsel %vm66, %v77, %v79
    %v81 = vshll.u32 %v41, 8
    %v82 = vmul.u32.u64.compose %v81, %v80
    %v83 = vextract.low.u32 %v82
    %v84 = vextract.high.u32 %v82
    %v85 = vmul.u32.u64.compose %v81, %v76
    %v86 = vextract.low.u32 %v85
    %v87 = vextract.high.u32 %v85
    %v88 = vmul.u32 %v81, %v72
    %v89 = vadd.s32 %v84, %v86
    %vm90 = vc.u32 %v84, %v86
    %v91 = vadd.s32 %v87, 1
    %v92 = vsel %vm90, %v91, %v87
    %v93 = vadd.s32 %v88, %v92
    %v94 = vadd.s32 %v93, 536870912
    %v95 = vshrl.u32 %v94, 30
    %v96 = vshll.u32 %v95, 30
    %v97 = vsub.s32 %v93, %v96
    %vm98 = vcmp.lt.s32.totalorder %v97, 0
    %v99 = vsub.s32 0, %v97
    %v100 = vsel %vm98, %v99, %v97
    %v101 = vclz %v100
    %v102 = vsub.s32 %v101, 2
    %vm103 = vcmp.gt.s32.totalorder 0, %v102
    %v104 = vsel %vm103, 0, %v102
    %v105 = vsub.s32 32, %v104
    %v106 = vshll.u32 %v97, %v104
    %v107 = vshrl.u32 %v89, %v105
    %v108 = vor.u32 %v106, %v107
    %v109 = vsub.s32 4294967266, %v104
    %v110 = vadd.s32 %v109, 127
    %v111 = vshll.u32 %v110, 23
    %v112 = vor.u32 4788187, %v111
    %v113 = vand.u32 2147483647, %v112
    %v115 = vcvt.s32.f32 %v108
    %v116 = vmul.f32 %v115, %v113
    %v117 = vxor.u32 %v116, 2147483648
    %v118 = vsel %vm35, %v117, %v116
    %v119 = vsub.s32 4, %v95
    %v120 = vsel %vm35, %v119, %v95
    %v121 = vsel %vm34, %v31, %v118
    %v122 = vsel %vm34, 0, %v120
    %v123 = vcosq.f32.pop %v121
    %v124 = vsinq.f32.pop %v121
    %vm125 = vweird.f32 %v31
    %v126 = vadd.s32 %v122, 3
    %v127 = vand.u32 %v126, 3
    %vm128 = vcmp.lt.s32.totalorder %v127, 2
    %vm129 = vcmp.eq.s32.totalorder %v127, 0
    %v130 = vxor.u32 %v124, 2147483648
    %v131 = vsel %vm129, %v123, %v130
    %vm132 = vcmp.eq.s32.totalorder %v127, 2
    %v133 = vxor.u32 %v123, 2147483648
    %v134 = vsel %vm132, %v133, %v124
    %v135 = vsel %vm128, %v131, %v134
    %v136 = vsel %vm125, nan, %v135
    %v137 = vand.u32 2147483647, %v32
    %vm138 = vcmp.le.f32.partialorder %v137, 0.7853982
    %vm139 = vcmp.lt.s32.totalorder %v32, 0
    %v140 = vand.u32 %v32, 2139095040
    %v141 = vshrl.u32 %v140, 23
    %v142 = vsub.s32 %v141, 127
    %v143 = vand.u32 2147483647, %v32
    %v144 = vand.u32 %v143, 8388607
    %v145 = vor.u32 %v144, 8388608
    %v146 = vsub.s32 0, %v145
    %v147 = vadd.s32 %v142, 1
    %vm148 = vcmp.gt.s32.totalorder %v147, 0
    %v149 = vsel %vm148, %v147, 0
    %v150 = vshrl.u32 %v149, 5
    %v151 = vand.u32 %v149, 31
    %v152 = vsub.s32 32, %v151
    %v153 = vshrl.u32 683565275, %v152
    %v154 = vshll.u32 683565275, %v151
    %v155 = vshrl.u32 2475754826, %v152
    %v156 = vor.u32 %v154, %v155
    %v157 = vshll.u32 2475754826, %v151
    %v158 = vshrl.u32 2131351028, %v152
    %v159 = vor.u32 %v157, %v158
    %v160 = vshll.u32 2131351028, %v151
    %v161 = vshrl.u32 2102212464, %v152
    %v162 = vor.u32 %v160, %v161
    %v163 = vshll.u32 2102212464, %v151
    %v164 = vshrl.u32 920167782, %v152
    %v165 = vor.u32 %v163, %v164
    %v166 = vshll.u32 920167782, %v151
    %v167 = vshrl.u32 1326507024, %v152
    %v168 = vor.u32 %v166, %v167
    %vm169 = vcmp.lt.s32.totalorder %v150, 1
    %vm170 = vcmp.lt.s32.totalorder %v150, 2
    %vm171 = vcmp.lt.s32.totalorder %v150, 3
    %vm172 = vcmp.lt.s32.totalorder %v150, 4
    %v173 = vsel %vm169, %v153, %v156
    %v174 = vsel %vm172, %v162, 2102212464
    %v175 = vsel %vm171, %v159, %v174
    %v176 = vsel %vm170, %v173, %v175
    %v177 = vsel %vm169, %v156, %v159
    %v178 = vsel %vm172, %v165, 920167782
    %v179 = vsel %vm171, %v162, %v178
    %v180 = vsel %vm170, %v177, %v179
    %v181 = vsel %vm169, %v159, %v162
    %v182 = vsel %vm172, %v168, 1326507024
    %v183 = vsel %vm171, %v165, %v182
    %v184 = vsel %vm170, %v181, %v183
    %v185 = vshll.u32 %v145, 8
    %v186 = vmul.u32.u64.compose %v185, %v184
    %v187 = vextract.low.u32 %v186
    %v188 = vextract.high.u32 %v186
    %v189 = vmul.u32.u64.compose %v185, %v180
    %v190 = vextract.low.u32 %v189
    %v191 = vextract.high.u32 %v189
    %v192 = vmul.u32 %v185, %v176
    %v193 = vadd.s32 %v188, %v190
    %vm194 = vc.u32 %v188, %v190
    %v195 = vadd.s32 %v191, 1
    %v196 = vsel %vm194, %v195, %v191
    %v197 = vadd.s32 %v192, %v196
    %v198 = vadd.s32 %v197, 536870912
    %v199 = vshrl.u32 %v198, 30
    %v200 = vshll.u32 %v199, 30
    %v201 = vsub.s32 %v197, %v200
    %vm202 = vcmp.lt.s32.totalorder %v201, 0
    %v203 = vsub.s32 0, %v201
    %v204 = vsel %vm202, %v203, %v201
    %v205 = vclz %v204
    %v206 = vsub.s32 %v205, 2
    %vm207 = vcmp.gt.s32.totalorder 0, %v206
    %v208 = vsel %vm207, 0, %v206
    %v209 = vsub.s32 32, %v208
    %v210 = vshll.u32 %v201, %v208
    %v211 = vshrl.u32 %v193, %v209
    %v212 = vor.u32 %v210, %v211
    %v213 = vsub.s32 4294967266, %v208
    %v214 = vadd.s32 %v213, 127
    %v215 = vshll.u32 %v214, 23
    %v216 = vor.u32 4788187, %v215
    %v217 = vand.u32 2147483647, %v216
    %v219 = vcvt.s32.f32 %v212
    %v220 = vmul.f32 %v219, %v217
    %v221 = vxor.u32 %v220, 2147483648
    %v222 = vsel %vm139, %v221, %v220
    %v223 = vsub.s32 4, %v199
    %v224 = vsel %vm139, %v223, %v199
    %v225 = vsel %vm138, %v32, %v222
    %v226 = vsel %vm138, 0, %v224
    %v227 = vcosq.f32.pop %v225
    %v228 = vsinq.f32.pop %v225
    %vm229 = vweird.f32 %v32
    %v230 = vadd.s32 %v226, 3
    %v231 = vand.u32 %v230, 3
    %vm232 = vcmp.lt.s32.totalorder %v231, 2
    %vm233 = vcmp.eq.s32.totalorder %v231, 0
    %v234 = vxor.u32 %v228, 2147483648
    %v235 = vsel %vm233, %v227, %v234
    %vm236 = vcmp.eq.s32.totalorder %v231, 2
    %v237 = vxor.u32 %v227, 2147483648
    %v238 = vsel %vm236, %v237, %v228
    %v239 = vsel %vm232, %v235, %v238
    %v240 = vsel %vm229, nan, %v239
    %vm241 = vcmask 130048
    %242 = vst.msk [vmem:[#allocation2] sm:$0xff] %vm241, %v136
    %243 = vst.msk [vmem:[#allocation2 + $0x8] sm:$0xff] %vm241, %v240
    %v244 = vand.u32 2147483647, %v31
    %vm245 = vcmp.le.f32.partialorder %v244, 0.7853982
    %vm246 = vcmp.lt.s32.totalorder %v31, 0
    %v247 = vand.u32 %v31, 2139095040
    %v248 = vshrl.u32 %v247, 23
    %v249 = vsub.s32 %v248, 127
    %v250 = vand.u32 2147483647, %v31
    %v251 = vand.u32 %v250, 8388607
    %v252 = vor.u32 %v251, 8388608
    %v253 = vsub.s32 0, %v252
    %v254 = vadd.s32 %v249, 1
    %vm255 = vcmp.gt.s32.totalorder %v254, 0
    %v256 = vsel %vm255, %v254, 0
    %v257 = vshrl.u32 %v256, 5
    %v258 = vand.u32 %v256, 31
    %v259 = vsub.s32 32, %v258
    %v260 = vshrl.u32 683565275, %v259
    %v261 = vshll.u32 683565275, %v258
    %v262 = vshrl.u32 2475754826, %v259
    %v263 = vor.u32 %v261, %v262
    %v264 = vshll.u32 2475754826, %v258
    %v265 = vshrl.u32 2131351028, %v259
    %v266 = vor.u32 %v264, %v265
    %v267 = vshll.u32 2131351028, %v258
    %v268 = vshrl.u32 2102212464, %v259
    %v269 = vor.u32 %v267, %v268
    %v270 = vshll.u32 2102212464, %v258
    %v271 = vshrl.u32 920167782, %v259
    %v272 = vor.u32 %v270, %v271
    %v273 = vshll.u32 920167782, %v258
    %v274 = vshrl.u32 1326507024, %v259
    %v275 = vor.u32 %v273, %v274
    %vm276 = vcmp.lt.s32.totalorder %v257, 1
    %vm277 = vcmp.lt.s32.totalorder %v257, 2
    %vm278 = vcmp.lt.s32.totalorder %v257, 3
    %vm279 = vcmp.lt.s32.totalorder %v257, 4
    %v280 = vsel %vm276, %v260, %v263
    %v281 = vsel %vm279, %v269, 2102212464
    %v282 = vsel %vm278, %v266, %v281
    %v283 = vsel %vm277, %v280, %v282
    %v284 = vsel %vm276, %v263, %v266
    %v285 = vsel %vm279, %v272, 920167782
    %v286 = vsel %vm278, %v269, %v285
    %v287 = vsel %vm277, %v284, %v286
    %v288 = vsel %vm276, %v266, %v269
    %v289 = vsel %vm279, %v275, 1326507024
    %v290 = vsel %vm278, %v272, %v289
    %v291 = vsel %vm277, %v288, %v290
    %v292 = vshll.u32 %v252, 8
    %v293 = vmul.u32.u64.compose %v292, %v291
    %v294 = vextract.low.u32 %v293
    %v295 = vextract.high.u32 %v293
    %v296 = vmul.u32.u64.compose %v292, %v287
    %v297 = vextract.low.u32 %v296
    %v298 = vextract.high.u32 %v296
    %v299 = vmul.u32 %v292, %v283
    %v300 = vadd.s32 %v295, %v297
    %vm301 = vc.u32 %v295, %v297
    %v302 = vadd.s32 %v298, 1
    %v303 = vsel %vm301, %v302, %v298
    %v304 = vadd.s32 %v299, %v303
    %v305 = vadd.s32 %v304, 536870912
    %v306 = vshrl.u32 %v305, 30
    %v307 = vshll.u32 %v306, 30
    %v308 = vsub.s32 %v304, %v307
    %vm309 = vcmp.lt.s32.totalorder %v308, 0
    %v310 = vsub.s32 0, %v308
    %v311 = vsel %vm309, %v310, %v308
    %v312 = vclz %v311
    %v313 = vsub.s32 %v312, 2
    %vm314 = vcmp.gt.s32.totalorder 0, %v313
    %v315 = vsel %vm314, 0, %v313
    %v316 = vsub.s32 32, %v315
    %v317 = vshll.u32 %v308, %v315
    %v318 = vshrl.u32 %v300, %v316
    %v319 = vor.u32 %v317, %v318
    %v320 = vsub.s32 4294967266, %v315
    %v321 = vadd.s32 %v320, 127
    %v322 = vshll.u32 %v321, 23
    %v323 = vor.u32 4788187, %v322
    %v324 = vand.u32 2147483647, %v323
    %v326 = vcvt.s32.f32 %v319
    %v327 = vmul.f32 %v326, %v324
    %v328 = vxor.u32 %v327, 2147483648
    %v329 = vsel %vm246, %v328, %v327
    %v330 = vsub.s32 4, %v306
    %v331 = vsel %vm246, %v330, %v306
    %v332 = vsel %vm245, %v31, %v329
    %v333 = vsel %vm245, 0, %v331
    %v334 = vcosq.f32.pop %v332
    %v335 = vsinq.f32.pop %v332
    %vm336 = vweird.f32 %v31
    %v337 = vand.u32 %v333, 3
    %vm338 = vcmp.lt.s32.totalorder %v337, 2
    %vm339 = vcmp.eq.s32.totalorder %v337, 0
    %v340 = vxor.u32 %v335, 2147483648
    %v341 = vsel %vm339, %v334, %v340
    %vm342 = vcmp.eq.s32.totalorder %v337, 2
    %v343 = vxor.u32 %v334, 2147483648
    %v344 = vsel %vm342, %v343, %v335
    %v345 = vsel %vm338, %v341, %v344
    %v346 = vsel %vm336, nan, %v345
    %v347 = vand.u32 2147483647, %v32
    %vm348 = vcmp.le.f32.partialorder %v347, 0.7853982
    %vm349 = vcmp.lt.s32.totalorder %v32, 0
    %v350 = vand.u32 %v32, 2139095040
    %v351 = vshrl.u32 %v350, 23
    %v352 = vsub.s32 %v351, 127
    %v353 = vand.u32 2147483647, %v32
    %v354 = vand.u32 %v353, 8388607
    %v355 = vor.u32 %v354, 8388608
    %v356 = vsub.s32 0, %v355
    %v357 = vadd.s32 %v352, 1
    %vm358 = vcmp.gt.s32.totalorder %v357, 0
    %v359 = vsel %vm358, %v357, 0
    %v360 = vshrl.u32 %v359, 5
    %v361 = vand.u32 %v359, 31
    %v362 = vsub.s32 32, %v361
    %v363 = vshrl.u32 683565275, %v362
    %v364 = vshll.u32 683565275, %v361
    %v365 = vshrl.u32 2475754826, %v362
    %v366 = vor.u32 %v364, %v365
    %v367 = vshll.u32 2475754826, %v361
    %v368 = vshrl.u32 2131351028, %v362
    %v369 = vor.u32 %v367, %v368
    %v370 = vshll.u32 2131351028, %v361
    %v371 = vshrl.u32 2102212464, %v362
    %v372 = vor.u32 %v370, %v371
    %v373 = vshll.u32 2102212464, %v361
    %v374 = vshrl.u32 920167782, %v362
    %v375 = vor.u32 %v373, %v374
    %v376 = vshll.u32 920167782, %v361
    %v377 = vshrl.u32 1326507024, %v362
    %v378 = vor.u32 %v376, %v377
    %vm379 = vcmp.lt.s32.totalorder %v360, 1
    %vm380 = vcmp.lt.s32.totalorder %v360, 2
    %vm381 = vcmp.lt.s32.totalorder %v360, 3
    %vm382 = vcmp.lt.s32.totalorder %v360, 4
    %v383 = vsel %vm379, %v363, %v366
    %v384 = vsel %vm382, %v372, 2102212464
    %v385 = vsel %vm381, %v369, %v384
    %v386 = vsel %vm380, %v383, %v385
    %v387 = vsel %vm379, %v366, %v369
    %v388 = vsel %vm382, %v375, 920167782
    %v389 = vsel %vm381, %v372, %v388
    %v390 = vsel %vm380, %v387, %v389
    %v391 = vsel %vm379, %v369, %v372
    %v392 = vsel %vm382, %v378, 1326507024
    %v393 = vsel %vm381, %v375, %v392
    %v394 = vsel %vm380, %v391, %v393
    %v395 = vshll.u32 %v355, 8
    %v396 = vmul.u32.u64.compose %v395, %v394
    %v397 = vextract.low.u32 %v396
    %v398 = vextract.high.u32 %v396
    %v399 = vmul.u32.u64.compose %v395, %v390
    %v400 = vextract.low.u32 %v399
    %v401 = vextract.high.u32 %v399
    %v402 = vmul.u32 %v395, %v386
    %v403 = vadd.s32 %v398, %v400
    %vm404 = vc.u32 %v398, %v400
    %v405 = vadd.s32 %v401, 1
    %v406 = vsel %vm404, %v405, %v401
    %v407 = vadd.s32 %v402, %v406
    %v408 = vadd.s32 %v407, 536870912
    %v409 = vshrl.u32 %v408, 30
    %v410 = vshll.u32 %v409, 30
    %v411 = vsub.s32 %v407, %v410
    %vm412 = vcmp.lt.s32.totalorder %v411, 0
    %v413 = vsub.s32 0, %v411
    %v414 = vsel %vm412, %v413, %v411
    %v415 = vclz %v414
    %v416 = vsub.s32 %v415, 2
    %vm417 = vcmp.gt.s32.totalorder 0, %v416
    %v418 = vsel %vm417, 0, %v416
    %v419 = vsub.s32 32, %v418
    %v420 = vshll.u32 %v411, %v418
    %v421 = vshrl.u32 %v403, %v419
    %v422 = vor.u32 %v420, %v421
    %v423 = vsub.s32 4294967266, %v418
    %v424 = vadd.s32 %v423, 127
    %v425 = vshll.u32 %v424, 23
    %v426 = vor.u32 4788187, %v425
    %v427 = vand.u32 2147483647, %v426
    %v429 = vcvt.s32.f32 %v422
    %v430 = vmul.f32 %v429, %v427
    %v431 = vxor.u32 %v430, 2147483648
    %v432 = vsel %vm349, %v431, %v430
    %v433 = vsub.s32 4, %v409
    %v434 = vsel %vm349, %v433, %v409
    %v435 = vsel %vm348, %v32, %v432
    %v436 = vsel %vm348, 0, %v434
    %v437 = vcosq.f32.pop %v435
    %v438 = vsinq.f32.pop %v435
    %vm439 = vweird.f32 %v32
    %v440 = vand.u32 %v436, 3
    %vm441 = vcmp.lt.s32.totalorder %v440, 2
    %vm442 = vcmp.eq.s32.totalorder %v440, 0
    %v443 = vxor.u32 %v438, 2147483648
    %v444 = vsel %vm442, %v437, %v443
    %vm445 = vcmp.eq.s32.totalorder %v440, 2
    %v446 = vxor.u32 %v437, 2147483648
    %v447 = vsel %vm445, %v446, %v438
    %v448 = vsel %vm441, %v444, %v447
    %v449 = vsel %vm439, nan, %v448
    %452 = vrot.lane.b32.xlu0 %v346, 16
    %v453 = vpop.permute.xlu0 %452
    %454 = vrot.lane.b32.xlu0 %v449, 16
    %v455 = vpop.permute.xlu0 %454
    %vm458 = vcmask 261248
    %459 = vst.msk [vmem:[#allocation2] sm:$0xff] %vm458, %v453
    %460 = vst.msk [vmem:[#allocation2 + $0x8] sm:$0xff] %vm458, %v455
    // Predicated region
    $region10: #{tpu_custom_call.1} parent=1 // pred_check
      _
    $region11: #{tpu_custom_call.1} parent=1 // pred_check_branch
      %462 = sbr.rel (0) target = $region13
    $region12: #{tpu_custom_call.1} parent=1 // pred_region
      %s464 = ssub.s32 256, 256
      %465 = vsyncadd [#allocation3], %s464
      %s466 = sshll.u32 [#allocation2], 4
      %s467 = int_to_ptr.vmem [resolvable:$true] %s466
      %472 = dma.vmem_to_hbm [thread:$0]  %s467, 256, %s2, [#allocation3], 128, 128, 8
    $region13: #{tpu_custom_call.1} parent=1 // pred_fallthru
      _
    // Predicated region
    $region14: #{tpu_custom_call.1} parent=1 // pred_check
      _
    $region15: #{tpu_custom_call.1} parent=1 // pred_check_branch
      %474 = sbr.rel (0) target = $region17
    $region16: #{tpu_custom_call.1} parent=1 // pred_region
      %475 = dma.done [#allocation3], 256
    $region17: #{tpu_custom_call.1} parent=1 // pred_fallthru
      _
    %476 = vsyncpa [#allocation3], 1

</llo_original>
